<compile_context>
chip_gen: v7x
topology: tpu7x:2x2x1
jax: 0.10.0
libtpu: 0.0.40
codegen_flags: <defaults>
</compile_context>

<pallas_src>
import functools
import numpy as np
import jax
import jax.numpy as jnp
from jax.experimental import pallas as pl
from jax.experimental.pallas import tpu as pltpu

MAX_ROW_TILE = 4096        # rows per grid step for thin row-tiled kernels
ATTN_GROUP_ROWS = 128      # 16 windows x 8 pts -> one 128x128 MXU block
ATTN_MAX_ROWS = 1024       # rows per grid step for the fused swin-block kernel
VMEM_LIMIT = 32 * 1024 * 1024
BN_EPS = 1e-5
LN_EPS = 1e-5

DTYPE = jnp.bfloat16       # storage dtype for activations & weights
F32 = jnp.float32          # compute dtype inside kernels

CONFIG = dict(
    in_channels=6,
    num_classes=4,
    base_grid_size=0.05,
    num_layers=3,
    depths=(1, 1, 1),
    channels=(16, 32, 48),
    num_heads=(2, 2, 2),
    window_sizes=(4, 4, 4),
    win_pts=8,          # points per sparse window (fixed-occupancy approximation)
    down_group=2,       # points pooled per coarse voxel (stand-in for kNN k)
)


# ----------------------------------------------------------------------------
# small helpers
# ----------------------------------------------------------------------------
def _ceil_to(n, m):
    return ((n + m - 1) // m) * m


def _row_tiling(n, max_tile=MAX_ROW_TILE):
    """Padded row count + row tile; prefers >=2 grid steps (v7x has 2 TCs)."""
    n_pad = _ceil_to(max(n, 1), 16)
    if n_pad <= max_tile:
        if n_pad >= 512:                 # split so both v7x cores get work
            return n_pad, n_pad // 2
        return n_pad, n_pad
    n_pad = _ceil_to(n, max_tile)
    return n_pad, max_tile


def _attn_tiling(n):
    """Rows padded to a multiple of ATTN_GROUP_ROWS + rows per grid step."""
    tot = _ceil_to(max(n, 1), ATTN_GROUP_ROWS)
    k = tot // ATTN_GROUP_ROWS
    max_g = ATTN_MAX_ROWS // ATTN_GROUP_ROWS
    if k <= max_g:
        if k >= 2 and k % 2 == 0:        # 2 even steps when possible (v7x)
            return tot, (k // 2) * ATTN_GROUP_ROWS
        return tot, tot
    steps = -(-k // max_g)
    g = -(-k // steps)
    return steps * g * ATTN_GROUP_ROWS, g * ATTN_GROUP_ROWS


def _pad_rows(x, n_pad):
    n = x.shape[0]
    if n == n_pad:
        return x
    return jnp.pad(x, ((0, n_pad - n),) + ((0, 0),) * (x.ndim - 1))


def _row_map(i):
    return (i, 0)


def _bcast_map(*_, ndim):
    return (0,) * ndim


def _apply_act(y, activation):
    if activation == "relu":
        return jnp.maximum(y, 0.0)
    if activation == "gelu":
        return jax.nn.gelu(y, approximate=True)
    return y


# ----------------------------------------------------------------------------
# Pallas kernels
# ----------------------------------------------------------------------------
def _ln(x, g, b):
    mu = jnp.mean(x, axis=-1, keepdims=True)
    var = jnp.mean((x - mu) ** 2, axis=-1, keepdims=True)
    return (x - mu) * jax.lax.rsqrt(var + LN_EPS) * g + b


def _linear_kernel(x_ref, w_ref, b_ref, o_ref, *, activation):
    x = x_ref[...].astype(F32)
    y = jnp.dot(x, w_ref[...].astype(F32), preferred_element_type=F32)
    y = _apply_act(y + b_ref[...].astype(F32), activation)
    o_ref[...] = y.astype(o_ref.dtype)


def _ln_linear_kernel(x_ref, g_ref, b_ref, w_ref, bias_ref, o_ref, *, activation):
    h = _ln(x_ref[...].astype(F32), g_ref[...].astype(F32), b_ref[...].astype(F32))
    y = jnp.dot(h, w_ref[...].astype(F32), preferred_element_type=F32)
    y = _apply_act(y + bias_ref[...].astype(F32), activation)
    o_ref[...] = y.astype(o_ref.dtype)


def _ln_linear_add_kernel(x_ref, add_ref, g_ref, b_ref, w_ref, bias_ref, o_ref,
                          *, activation):
    h = _ln(x_ref[...].astype(F32), g_ref[...].astype(F32), b_ref[...].astype(F32))
    y = jnp.dot(h, w_ref[...].astype(F32), preferred_element_type=F32)
    y = _apply_act(y + bias_ref[...].astype(F32), activation)
    y = y + add_ref[...].astype(F32)
    o_ref[...] = y.astype(o_ref.dtype)


def _linear_relu_linear_kernel(x_ref, w1_ref, b1_ref, w2_ref, b2_ref, o_ref):
    x = x_ref[...].astype(F32)
    h = jnp.dot(x, w1_ref[...].astype(F32), preferred_element_type=F32)
    h = jnp.maximum(h + b1_ref[...].astype(F32), 0.0)
    y = jnp.dot(h, w2_ref[...].astype(F32), preferred_element_type=F32)
    o_ref[...] = (y + b2_ref[...].astype(F32)).astype(o_ref.dtype)


def _knn_pool_kernel(x_ref, g_ref, b_ref, w_ref, o_ref):
    """x_ref: (group, TM, Cin) — per-neighbor LN+Linear, max over neighbors."""
    g = g_ref[...].astype(F32)
    b = b_ref[...].astype(F32)
    w = w_ref[...].astype(F32)
    acc = None
    for j in range(x_ref.shape[0]):          # static, tiny (group=2)
        xj = _ln(x_ref[j].astype(F32), g, b)
        yj = jnp.dot(xj, w, preferred_element_type=F32)
        acc = yj if acc is None else jnp.maximum(acc, yj)
    o_ref[...] = acc.astype(o_ref.dtype)


def _swin_block_kernel(x_ref, ln1g_ref, ln1b_ref, qkvw_ref, qkvb_ref,
                       projw_ref, projb_ref, ln2g_ref, ln2b_ref,
                       w1_ref, b1_ref, w2_ref, b2_ref, o_ref,
                       *, heads, win, grp_rows, n_valid, scale):
    """Entire SwinTransformerBlock on a block of window-sorted rows.

    LN1 -> QKV -> block-diagonal window attention -> proj + residual ->
    LN2 -> MLP(gelu) + residual.  Attention groups `grp_rows // win` windows
    into one 128-wide matmul per head (block-diagonal mask keeps windows
    independent); padded rows are masked as keys via their global row index.
    """
    x = x_ref[...].astype(F32)                           # (R, C)
    rows, c = x.shape
    dh = c // heads
    ng = rows // grp_rows

    # --- LN1 + QKV projection (3C stays in VMEM) ---
    h0 = _ln(x, ln1g_ref[...].astype(F32), ln1b_ref[...].astype(F32))
    qkv = jnp.dot(h0, qkvw_ref[...].astype(F32), preferred_element_type=F32)
    qkv = qkv + qkvb_ref[...].astype(F32)                # (R, 3C)

    # --- masks built in-kernel: block-diagonal (same window) & key validity ---
    qi = jax.lax.broadcasted_iota(jnp.int32, (grp_rows, grp_rows), 0)
    ki = jax.lax.broadcasted_iota(jnp.int32, (grp_rows, grp_rows), 1)
    same_win = (qi // win) == (ki // win)                # (GW, GW)
    base = pl.program_id(0) * rows
    g_off = jax.lax.broadcasted_iota(jnp.int32, (ng, 1, grp_rows), 0) * grp_rows
    k_off = jax.lax.broadcasted_iota(jnp.int32, (ng, 1, grp_rows), 2)
    key_ok = (base + g_off + k_off) < n_valid            # (ng, 1, GW)
    mask = jnp.where(jnp.logical_and(same_win[None, :, :], key_ok),
                     0.0, -1e9).astype(F32)              # (ng, GW, GW)

    # --- window attention, one 128x128 score matmul per group per head ---
    outs = []
    for h in range(heads):                               # static small loop
        q = qkv[:, h * dh:(h + 1) * dh].reshape(ng, grp_rows, dh) * scale
        k = qkv[:, c + h * dh: c + (h + 1) * dh].reshape(ng, grp_rows, dh)
        v = qkv[:, 2 * c + h * dh: 2 * c + (h + 1) * dh].reshape(ng, grp_rows, dh)
        s = jnp.einsum("gqd,gkd->gqk", q, k, preferred_element_type=F32) + mask
        s = s - jnp.max(s, axis=-1, keepdims=True)
        p = jnp.exp(s)
        p = p * pl.reciprocal(jnp.sum(p, axis=-1, keepdims=True), approx=True)
        o = jnp.einsum("gqk,gkd->gqd", p, v, preferred_element_type=F32)
        outs.append(o.reshape(rows, dh))
    attn = jnp.concatenate(outs, axis=-1)                # (R, C)

    # --- output projection + residual ---
    x1 = jnp.dot(attn, projw_ref[...].astype(F32), preferred_element_type=F32)
    x1 = x1 + projb_ref[...].astype(F32) + x

    # --- LN2 + MLP (gelu) + residual (4C intermediate stays in VMEM) ---
    h2 = _ln(x1, ln2g_ref[...].astype(F32), ln2b_ref[...].astype(F32))
    h2 = jnp.dot(h2, w1_ref[...].astype(F32), preferred_element_type=F32)
    h2 = jax.nn.gelu(h2 + b1_ref[...].astype(F32), approximate=True)
    y = jnp.dot(h2, w2_ref[...].astype(F32), preferred_element_type=F32)
    y = y + b2_ref[...].astype(F32) + x1
    o_ref[...] = y.astype(o_ref.dtype)


# ----------------------------------------------------------------------------
# Pallas wrappers
# ----------------------------------------------------------------------------
def _row_call(kernel, row_ins, bcast_ins, cout, out_dtype):
    """Run a row-tiled pointwise/matmul kernel over [N, *] inputs."""
    n = row_ins[0].shape[0]
    n_pad, tile = _row_tiling(n)
    padded = [_pad_rows(a, n_pad) for a in row_ins]
    in_specs = [pl.BlockSpec((tile, a.shape[1]), _row_map) for a in row_ins]
    in_specs += [pl.BlockSpec(tuple(a.shape),
                              functools.partial(_bcast_map, ndim=a.ndim))
                 for a in bcast_ins]
    out = pl.pallas_call(
        kernel,
        out_shape=jax.ShapeDtypeStruct((n_pad, cout), out_dtype),
        grid=(n_pad // tile,),
        in_specs=in_specs,
        out_specs=pl.BlockSpec((tile, cout), _row_map),
        compiler_params=pltpu.CompilerParams(
            dimension_semantics=("parallel",), vmem_limit_bytes=VMEM_LIMIT),
    )(*padded, *bcast_ins)
    return out[:n] if n_pad != n else out


def linear(x, w, b, activation="none", out_dtype=DTYPE):
    kern = functools.partial(_linear_kernel, activation=activation)
    return _row_call(kern, [x], [w, b.reshape(1, -1)], w.shape[1], out_dtype)


def ln_linear(x, g, b, w, bias, add=None, activation="none"):
    cin = x.shape[1]
    cout = w.shape[1]
    bcast = [g.reshape(1, cin), b.reshape(1, cin), w, bias.reshape(1, cout)]
    if add is None:
        kern = functools.partial(_ln_linear_kernel, activation=activation)
        return _row_call(kern, [x], bcast, cout, DTYPE)
    kern = functools.partial(_ln_linear_add_kernel, activation=activation)
    return _row_call(kern, [x, add], bcast, cout, DTYPE)


def classifier(x, cp):
    # lane-dense logits: pad class dim to 128 inside the kernel, slice on host.
    nc = cp["w2"].shape[1]
    ncp = _ceil_to(nc, 128)
    w2 = jnp.pad(cp["w2"], ((0, 0), (0, ncp - nc)))
    b2 = jnp.pad(cp["b2"], ((0, ncp - nc),))
    bcast = [cp["w1"], cp["b1"].reshape(1, -1), w2, b2.reshape(1, -1)]
    out = _row_call(_linear_relu_linear_kernel, [x], bcast, ncp, jnp.float32)
    return out[:, :nc]


def knn_pool(x_nbr, ln_g, ln_b, w):
    """x_nbr: (group, M, Cin) -> (M, Cout) via per-neighbor LN+Linear + max."""
    g, m, cin = x_nbr.shape
    cout = w.shape[1]
    m_pad, tm = _row_tiling(m)
    if m_pad != m:
        x_nbr = jnp.pad(x_nbr, ((0, 0), (0, m_pad - m), (0, 0)))
    out = pl.pallas_call(
        _knn_pool_kernel,
        out_shape=jax.ShapeDtypeStruct((m_pad, cout), DTYPE),
        grid=(m_pad // tm,),
        in_specs=[
            pl.BlockSpec((g, tm, cin), lambda i: (0, i, 0)),
            pl.BlockSpec((1, cin), lambda i: (0, 0)),
            pl.BlockSpec((1, cin), lambda i: (0, 0)),
            pl.BlockSpec((cin, cout), lambda i: (0, 0)),
        ],
        out_specs=pl.BlockSpec((tm, cout), _row_map),
        compiler_params=pltpu.CompilerParams(
            dimension_semantics=("parallel",), vmem_limit_bytes=VMEM_LIMIT),
    )(x_nbr, ln_g.reshape(1, cin), ln_b.reshape(1, cin), w)
    return out[:m] if m_pad != m else out


def swin_block_sorted(xs, n_valid, lp, num_heads, win_pts, tile):
    """One fused SwinTransformerBlock on window-sorted, padded rows."""
    tot, c = xs.shape
    kern = functools.partial(
        _swin_block_kernel, heads=num_heads, win=win_pts,
        grp_rows=ATTN_GROUP_ROWS, n_valid=n_valid,
        scale=(c // num_heads) ** -0.5)
    bcast = [lp["ln1_g"].reshape(1, c), lp["ln1_b"].reshape(1, c),
             lp["qkv_w"], lp["qkv_b"].reshape(1, 3 * c),
             lp["proj_w"], lp["proj_b"].reshape(1, c),
             lp["ln2_g"].reshape(1, c), lp["ln2_b"].reshape(1, c),
             lp["mlp_w1"], lp["mlp_b1"].reshape(1, 4 * c),
             lp["mlp_w2"], lp["mlp_b2"].reshape(1, c)]
    in_specs = [pl.BlockSpec((tile, c), _row_map)]
    in_specs += [pl.BlockSpec(tuple(a.shape),
                              functools.partial(_bcast_map, ndim=a.ndim))
                 for a in bcast]
    return pl.pallas_call(
        kern,
        out_shape=jax.ShapeDtypeStruct((tot, c), DTYPE),
        grid=(tot // tile,),
        in_specs=in_specs,
        out_specs=pl.BlockSpec((tile, c), _row_map),
        compiler_params=pltpu.CompilerParams(
            dimension_semantics=("parallel",), vmem_limit_bytes=VMEM_LIMIT),
    )(xs, *bcast)


# ----------------------------------------------------------------------------
# Model pieces (glue in plain JAX, compute in kernels above)
# ----------------------------------------------------------------------------
def make_window_order(batch, grid, win_size, n_pad):
    """Lexsort points into consecutive-group windows; padded rows sort last."""
    wc = grid // win_size
    n = batch.shape[0]
    b = batch.astype(jnp.int32)
    if n_pad != n:
        pad = n_pad - n
        b = jnp.concatenate([b, jnp.full((pad,), jnp.iinfo(jnp.int32).max,
                                         jnp.int32)])
        wc = jnp.concatenate([wc, jnp.zeros((pad, 3), wc.dtype)], axis=0)
    order = jnp.lexsort((wc[:, 2], wc[:, 1], wc[:, 0], b))   # no hash overflow
    inv_order = jnp.argsort(order)
    return order, inv_order


def grid_knn_downsample(x, batch, grid, dp, stride, group):
    """GridKNNDownsample analog: LN -> Linear -> max-pool over a point group."""
    n = x.shape[0]
    cg = grid // stride
    order = jnp.lexsort((cg[:, 2], cg[:, 1], cg[:, 0], batch))
    inv_order = jnp.argsort(order)
    m = -(-n // group)
    n_pad = m * group
    pad_idx = jnp.concatenate(
        [order, jnp.full((n_pad - n,), order[-1], dtype=order.dtype)])
    idx_by_group = pad_idx.reshape(m, group)
    x_nbr = jnp.take(x, idx_by_group.T.reshape(-1), axis=0
                     ).reshape(group, m, x.shape[1])
    new_x = knn_pool(x_nbr, dp["ln_g"], dp["ln_b"], dp["w"])
    rep = idx_by_group[:, 0]
    new_batch = jnp.take(batch, rep, axis=0)
    new_grid = jnp.take(cg, rep, axis=0)
    parent = inv_order // group          # fine point -> coarse parent index
    return new_x, new_batch, new_grid, parent


def upsample(coarse, skip, parent, up):
    up_f = ln_linear(coarse, up["ln2_g"], up["ln2_b"], up["w2"], up["b2"])
    gathered = jnp.take(up_f, parent, axis=0)     # nearest-parent (up_k approx)
    return ln_linear(skip, up["ln1_g"], up["ln1_b"], up["w1"], up["b1"],
                     add=gathered)


# ----------------------------------------------------------------------------
# Parameter init (deterministic, trunc_normal std=0.02 / LN identity,
#                 BN with identity running stats folded into weights/bias)
# ----------------------------------------------------------------------------
def init_params(key, cfg):
    keys = iter(jax.random.split(key, 256))

    def tn(shape):
        return 0.02 * jax.random.truncated_normal(next(keys), -2.0, 2.0, shape,
                                                  jnp.float32)

    def zeros(*s):
        return jnp.zeros(s, jnp.float32)

    def ones(*s):
        return jnp.ones(s, jnp.float32)

    ch = cfg["channels"]
    bn_scale = float(1.0 / np.sqrt(1.0 + BN_EPS))   # identity running stats

    p = {}
    # BN folded: w' = w * scale, b' = b * scale + shift (shift = 0 at init)
    p["stem"] = dict(w=tn((cfg["in_channels"], ch[0])) * bn_scale, b=zeros(ch[0]))
    p["layers"] = []
    for i in range(cfg["num_layers"]):
        c = ch[i]
        p["layers"].append(dict(
            ln1_g=ones(c), ln1_b=zeros(c),
            qkv_w=tn((c, 3 * c)), qkv_b=zeros(3 * c),
            proj_w=tn((c, c)), proj_b=zeros(c),
            ln2_g=ones(c), ln2_b=zeros(c),
            mlp_w1=tn((c, 4 * c)), mlp_b1=zeros(4 * c),
            mlp_w2=tn((4 * c, c)), mlp_b2=zeros(c)))
    p["down"] = [dict(ln_g=ones(ch[i]), ln_b=zeros(ch[i]),
                      w=tn((ch[i], ch[i + 1])))
                 for i in range(cfg["num_layers"] - 1)]
    p["up"] = []
    for i in range(cfg["num_layers"] - 1, 0, -1):
        p["up"].append(dict(
            ln2_g=ones(ch[i]), ln2_b=zeros(ch[i]),
            w2=tn((ch[i], ch[i - 1])), b2=zeros(ch[i - 1]),
            ln1_g=ones(ch[i - 1]), ln1_b=zeros(ch[i - 1]),
            w1=tn((ch[i - 1], ch[i - 1])), b1=zeros(ch[i - 1])))
    p["cls"] = dict(w1=tn((ch[0], ch[0])) * bn_scale, b1=zeros(ch[0]),
                    w2=tn((ch[0], cfg["num_classes"])),
                    b2=zeros(cfg["num_classes"]))
    # bf16 storage (compute stays f32 inside the kernels)
    return jax.tree_util.tree_map(lambda a: a.astype(DTYPE), p)


# ----------------------------------------------------------------------------
# Forward
# ----------------------------------------------------------------------------
def swin3d_forward(params, data, cfg):
    coord = data["coord"]
    feat = data["feat"]
    coord_feat = data["coord_feat"]
    grid_coord = data["grid_coord"]
    offset = np.asarray(data["offset"])

    n_pts = coord.shape[0]
    counts = np.diff(np.concatenate([[0], offset]))
    batch = jnp.repeat(jnp.arange(len(offset), dtype=jnp.int32),
                       jnp.asarray(counts))

    full_feat = jnp.concatenate(
        [batch[:, None].astype(jnp.float32),
         coord / cfg["base_grid_size"],
         coord_feat / 1.001,
         feat], axis=1)

    # --- voxelization (UNWEIGHTED_AVERAGE), glue in numpy/JAX ---
    gb = np.asarray(batch)
    gg = np.asarray(grid_coord)
    key64 = (((gb.astype(np.int64) * 1_000_003 + gg[:, 0]) * 1_000_003
              + gg[:, 1]) * 1_000_003 + gg[:, 2])
    _, rep_idx, inv = np.unique(key64, return_index=True, return_inverse=True)
    m0 = rep_idx.shape[0]
    inv = jnp.asarray(inv.reshape(-1), jnp.int32)
    counts_v = jax.ops.segment_sum(jnp.ones((n_pts,), jnp.float32), inv, m0)
    feat_vox_full = jax.ops.segment_sum(full_feat, inv, m0) / counts_v[:, None]
    cdim = coord_feat.shape[-1]
    _coords_sp = feat_vox_full[:, :cdim + 4]   # carried for fidelity, cRSE unused
    x = feat_vox_full[:, cdim + 4:].astype(DTYPE)
    vox_batch = jnp.asarray(gb[rep_idx], jnp.int32)
    vox_grid = jnp.asarray(gg[rep_idx], jnp.int32)

    # --- stem: MinkConvBNRelu (center-tap approx of 3x3x3 sparse conv, BN folded)
    x = linear(x, params["stem"]["w"], params["stem"]["b"], activation="relu")

    # --- encoder ---
    stack = []
    parents = []
    batch_i, grid_i = vox_batch, vox_grid
    for i in range(cfg["num_layers"]):
        n_i = x.shape[0]
        tot, tile = _attn_tiling(n_i)
        # sort rows into window order ONCE per resolution stage (padded rows last)
        order, inv_order = make_window_order(batch_i, grid_i,
                                             cfg["window_sizes"][i], tot)
        xs = jnp.take(_pad_rows(x, tot), order, axis=0)
        for _ in range(cfg["depths"][i]):
            xs = swin_block_sorted(xs, n_i, params["layers"][i],
                                   cfg["num_heads"][i], cfg["win_pts"], tile)
        x = jnp.take(xs, inv_order, axis=0)[:n_i]
        stack.append((x, batch_i, grid_i))
        if i < cfg["num_layers"] - 1:
            x, batch_i, grid_i, parent = grid_knn_downsample(
                x, batch_i, grid_i, params["down"][i], stride=2,
                group=cfg["down_group"])
            parents.append(parent)

    # --- decoder ---
    x, batch_i, grid_i = stack.pop()
    for up in params["up"]:
        skip, sb, sg = stack.pop()
        parent = parents.pop()
        x = upsample(x, skip, parent, up)
        batch_i, grid_i = sb, sg

    # --- classifier (Linear+BN+ReLU+Linear, BN folded) + slice back to points ---
    out_vox = classifier(x, params["cls"])
    return out_vox[inv]


# ----------------------------------------------------------------------------
if __name__ == "__main__":
    cfg = CONFIG
    root = jax.random.PRNGKey(0)
    k_param, k_coord, k_feat, k_cfeat = jax.random.split(root, 4)

    pts_per_batch, n_batches = 48, 2
    n_pts = pts_per_batch * n_batches
    coord = jax.random.uniform(k_coord, (n_pts, 3), jnp.float32)
    feat = jax.random.normal(k_feat, (n_pts, cfg["in_channels"]), jnp.float32)
    coord_feat = jax.random.uniform(k_cfeat, (n_pts, 3), jnp.float32)
    grid_coord = jnp.floor(coord / cfg["base_grid_size"]).astype(jnp.int32)
    offset = jnp.array([pts_per_batch, n_pts], jnp.int32)

    data = dict(coord=coord, feat=feat, coord_feat=coord_feat,
                grid_coord=grid_coord, offset=offset)

    params = init_params(k_param, cfg)
    out = swin3d_forward(params, data, cfg)
    out = jax.block_until_ready(out)
    assert out.shape == (n_pts, cfg["num_classes"])
    assert bool(jnp.all(jnp.isfinite(out)))
    print("KERNEL_OK")
</pallas_src>

<mosaic_0001>
module attributes {stable_mosaic.version = 11 : i64} {
  func.func @_linear_kernel(%arg0: i32, %arg1: memref<96x6xbf16, #tpu.memory_space<vmem>>, %arg2: memref<6x16xbf16, #tpu.memory_space<vmem>>, %arg3: memref<1x16xbf16, #tpu.memory_space<vmem>>, %arg4: memref<96x16xbf16, #tpu.memory_space<vmem>>) attributes {dimension_semantics = [#tpu.dimension_semantics<parallel>], iteration_bounds = array<i64: 1>, scalar_prefetch = 0 : i64, scratch_operands = 0 : i64, tpu.core_type = #tpu.core_type<tc>, window_params = [{transform_indices = @transform_0, window_bounds = array<i64: 96, 6>}, {pipeline_mode = #tpu.pipeline_mode<synchronous>, transform_indices = @transform_1, window_bounds = array<i64: 6, 16>}, {pipeline_mode = #tpu.pipeline_mode<synchronous>, transform_indices = @transform_2, window_bounds = array<i64: 1, 16>}, {transform_indices = @transform_3, window_bounds = array<i64: 96, 16>}]} {
    %c0 = arith.constant 0 : index
    %c0_0 = arith.constant 0 : index
    %0 = vector.load %arg1[%c0, %c0_0] : memref<96x6xbf16, #tpu.memory_space<vmem>>, vector<96x6xbf16>
    %1 = arith.extf %0 : vector<96x6xbf16> to vector<96x6xf32>
    %c0_1 = arith.constant 0 : index
    %c0_2 = arith.constant 0 : index
    %2 = vector.load %arg2[%c0_1, %c0_2] : memref<6x16xbf16, #tpu.memory_space<vmem>>, vector<6x16xbf16>
    %3 = arith.extf %2 : vector<6x16xbf16> to vector<6x16xf32>
    %cst = arith.constant dense<0.000000e+00> : vector<96x16xf32>
    %4 = tpu.matmul %1, %3, %cst {dimension_numbers = #tpu.dot_dimension_numbers<[1], [0], [0], [1], [0, 0, 1, 1], [], []>} : vector<96x6xf32>, vector<6x16xf32>, vector<96x16xf32> -> vector<96x16xf32>
    %c0_3 = arith.constant 0 : index
    %c0_4 = arith.constant 0 : index
    %5 = vector.load %arg3[%c0_3, %c0_4] : memref<1x16xbf16, #tpu.memory_space<vmem>>, vector<1x16xbf16>
    %6 = arith.extf %5 : vector<1x16xbf16> to vector<1x16xf32>
    %7 = vector.broadcast %6 : vector<1x16xf32> to vector<96x16xf32>
    %8 = arith.addf %4, %7 : vector<96x16xf32>
    %cst_5 = arith.constant 0.000000e+00 : f32
    %9 = vector.broadcast %cst_5 : f32 to vector<96x16xf32>
    %10 = arith.maximumf %8, %9 : vector<96x16xf32>
    %11 = arith.truncf %10 : vector<96x16xf32> to vector<96x16xbf16>
    %c0_6 = arith.constant 0 : index
    %c0_7 = arith.constant 0 : index
    %12 = vector.load %arg4[%c0_6, %c0_7] : memref<96x16xbf16, #tpu.memory_space<vmem>>, vector<96x16xbf16>
    tpu.vector_store %arg4[%c0_6, %c0_7], %11 {strides = array<i32>} : memref<96x16xbf16, #tpu.memory_space<vmem>>, vector<96x16xbf16>,
    return
  }
  func.func @transform_0(%arg0: i32) -> (i32, i32) {
    %c0_i32 = arith.constant 0 : i32
    %c0_i32_0 = arith.constant 0 : i32
    return %arg0, %c0_i32 : i32, i32
  }
  func.func @transform_1(%arg0: i32) -> (i32, i32) {
    %c0_i32 = arith.constant 0 : i32
    %c0_i32_0 = arith.constant 0 : i32
    %c0_i32_1 = arith.constant 0 : i32
    return %c0_i32, %c0_i32_0 : i32, i32
  }
  func.func @transform_2(%arg0: i32) -> (i32, i32) {
    %c0_i32 = arith.constant 0 : i32
    %c0_i32_0 = arith.constant 0 : i32
    %c0_i32_1 = arith.constant 0 : i32
    return %c0_i32, %c0_i32_0 : i32, i32
  }
  func.func @transform_3(%arg0: i32) -> (i32, i32) {
    %c0_i32 = arith.constant 0 : i32
    %c0_i32_0 = arith.constant 0 : i32
    return %arg0, %c0_i32 : i32, i32
  }
}

</mosaic_0001>

<llo_original>
// kernel: tpu_custom_call.1
$region0: #{tpu_custom_call.1}
  #allocation0 [shape = 'u32[]', space=smem, size = 0x4, offset = 0x4, fixed_abs, tag = 'smem constant byte address 0x4 - core index']
  #allocation1 [shape = 'u32[144,128]{1,0:T(1,128)}', space=vmem, size = 0x12000, scoped, tag = 'internal scratch']
  %s0 = inlined_call_operand.vmem [shape: bf16[96,6], index: 0, kind: input, shape index: {}]
  %s1 = inlined_call_operand.vmem [shape: bf16[6,16], index: 1, kind: input, shape index: {}]
  %s2 = inlined_call_operand.vmem [shape: bf16[1,16], index: 2, kind: input, shape index: {}]
  %s3 = inlined_call_operand.vmem [shape: bf16[96,16], index: 3, kind: output, shape index: {}]
  %s4 = sld [smem:[#allocation0]]
  $region22: #{tpu_custom_call.1} parent=0
    _
  %s6 = ssub.s32 1, %s4
  %s7 = scalar_select 0, %s6, %s4
  // Predicated region
  $region2: #{tpu_custom_call.1} parent=0 // pred_check
    _
  $region3: #{tpu_custom_call.1} parent=0 // pred_check_branch
    %9 = sbr.rel (0) target = $region5
  $region4: #{tpu_custom_call.1} parent=0 // pred_region
    _
  $region5: #{tpu_custom_call.1} parent=0 // pred_fallthru
    _
  // Predicated region
  $region6: #{tpu_custom_call.1} parent=0 // pred_check
    _
  $region7: #{tpu_custom_call.1} parent=0 // pred_check_branch
    %11 = sbr.rel (0) target = $region9
  $region8: #{tpu_custom_call.1} parent=0 // pred_region
    _
  $region9: #{tpu_custom_call.1} parent=0 // pred_fallthru
    _
  // Predicated region
  $region10: #{tpu_custom_call.1} parent=0 // pred_check
    _
  $region11: #{tpu_custom_call.1} parent=0 // pred_check_branch
    %13 = sbr.rel (0) target = $region13
  $region12: #{tpu_custom_call.1} parent=0 // pred_region
    _
  $region13: #{tpu_custom_call.1} parent=0 // pred_fallthru
    _
  %v14 = vld [vmem:[%s0] sm:$0xf]
  %v15 = vld [vmem:[%s0 + $0x4] sm:$0xf]
  %v16 = vld [vmem:[%s0 + $0x8] sm:$0xf]
  %v17 = vld [vmem:[%s0 + $0xc] sm:$0xf]
  %v18 = vld [vmem:[%s0 + $0x10] sm:$0xf]
  %v19 = vld [vmem:[%s0 + $0x14] sm:$0xf]
  %v20 = vld [vmem:[%s0 + $0x18] sm:$0xf]
  %v21 = vld [vmem:[%s0 + $0x1c] sm:$0xf]
  %v22 = vld [vmem:[%s0 + $0x20] sm:$0xf]
  %v23 = vld [vmem:[%s0 + $0x24] sm:$0xf]
  %v24 = vld [vmem:[%s0 + $0x28] sm:$0xf]
  %v25 = vld [vmem:[%s0 + $0x2c] sm:$0xf]
  %v26 = vunpack.c.l.bf16 %v14
  %v27 = vunpack.c.l.bf16 %v15
  %v28 = vunpack.c.l.bf16 %v16
  %v29 = vunpack.c.l.bf16 %v17
  %v30 = vunpack.c.l.bf16 %v18
  %v31 = vunpack.c.l.bf16 %v19
  %v32 = vunpack.c.l.bf16 %v20
  %v33 = vunpack.c.l.bf16 %v21
  %v34 = vunpack.c.l.bf16 %v22
  %v35 = vunpack.c.l.bf16 %v23
  %v36 = vunpack.c.l.bf16 %v24
  %v37 = vunpack.c.l.bf16 %v25
  %v38 = vld [vmem:[%s1] sm:$0x7]
  %v39 = vunpack.c.l.bf16 %v38
  %v40 = vld [vmem:[%s2] sm:$0x1]
  %v41 = vunpack.c.l.bf16 %v40
  %v42 = vlaneseq
  %v43 = vshrl.u32 %v42, 7
  %v44 = vsub.s32 0, %v43
  %v45 = vrot.slane %v41, %v44
  %vm46 = vcmask 48128
  %v48 = vsel %vm46, %v26, 0
  %v51 = vsel %vm46, %v27, 0
  %v54 = vsel %vm46, %v28, 0
  %v57 = vsel %vm46, %v29, 0
  %v60 = vsel %vm46, %v30, 0
  %v63 = vsel %vm46, %v31, 0
  %v66 = vsel %vm46, %v32, 0
  %v69 = vsel %vm46, %v33, 0
  %v72 = vsel %vm46, %v34, 0
  %v75 = vsel %vm46, %v35, 0
  %v78 = vsel %vm46, %v36, 0
  %v81 = vsel %vm46, %v37, 0
  %vm83 = vcmask 1045504
  %v85 = vsel %vm83, %v39, 0
  %87 = vmatprep.subr.mxu0 0.0
  %88 = vmatpush1.msra.mxu0 %v85
  %89 = vmatprep.subr.mxu0 0.0
  %90 = vmatpush1.msra.mxu0 0.0
  %91 = vmatprep.subr.mxu0 0.0
  %92 = vmatpush1.msra.mxu0 0.0
  %93 = vmatprep.subr.mxu0 0.0
  %94 = vmatpush1.msra.mxu0 0.0
  %95 = vmatprep.subr.mxu0 0.0
  %96 = vmatpush1.msra.mxu0 0.0
  %97 = vmatprep.subr.mxu0 0.0
  %98 = vmatpush1.msra.mxu0 0.0
  %99 = vmatprep.subr.mxu0 0.0
  %100 = vmatpush1.msra.mxu0 0.0
  %101 = vmatprep.subr.mxu0 0.0
  %102 = vmatpush1.msra.mxu0 0.0
  %103 = vmatprep.subr.mxu0 0.0
  %104 = vmatpush1.msra.mxu0 0.0
  %105 = vmatprep.subr.mxu0 0.0
  %106 = vmatpush1.msra.mxu0 0.0
  %107 = vmatprep.subr.mxu0 0.0
  %108 = vmatpush1.msra.mxu0 0.0
  %109 = vmatprep.subr.mxu0 0.0
  %110 = vmatpush1.msra.mxu0 0.0
  %111 = vmatprep.subr.mxu0 0.0
  %112 = vmatpush1.msra.mxu0 0.0
  %113 = vmatprep.subr.mxu0 0.0
  %114 = vmatpush1.msra.mxu0 0.0
  %115 = vmatprep.subr.mxu0 0.0
  %116 = vmatpush1.msra.mxu0 0.0
  %117 = vmatprep.subr.mxu0 0.0
  %118 = vmatpush1.msra.mxu0 0.0
  %119 = vmatprep.subr.mxu0 0.0
  %120 = vmatpush1.msra.mxu0 0.0
  %121 = vmatprep.subr.mxu0 0.0
  %122 = vmatpush1.msra.mxu0 0.0
  %123 = vmatprep.subr.mxu0 0.0
  %124 = vmatpush1.msra.mxu0 0.0
  %125 = vmatprep.subr.mxu0 0.0
  %126 = vmatpush1.msra.mxu0 0.0
  %127 = vmatprep.subr.mxu0 0.0
  %128 = vmatpush1.msra.mxu0 0.0
  %129 = vmatprep.subr.mxu0 0.0
  %130 = vmatpush1.msra.mxu0 0.0
  %131 = vmatprep.subr.mxu0 0.0
  %132 = vmatpush1.msra.mxu0 0.0
  %133 = vmatprep.subr.mxu0 0.0
  %134 = vmatpush1.msra.mxu0 0.0
  %135 = vmatprep.subr.mxu0 0.0
  %136 = vmatpush1.msra.mxu0 0.0
  %137 = vmatprep.subr.mxu0 0.0
  %138 = vmatpush1.msra.mxu0 0.0
  %139 = vmatprep.subr.mxu0 0.0
  %140 = vmatpush1.msra.mxu0 0.0
  %141 = vmatprep.subr.mxu0 0.0
  %142 = vmatpush1.msra.mxu0 0.0
  %143 = vmatprep.subr.mxu0 0.0
  %144 = vmatpush1.msra.mxu0 0.0
  %145 = vmatprep.subr.mxu0 0.0
  %146 = vmatpush1.msra.mxu0 0.0
  %147 = vmatprep.subr.mxu0 0.0
  %148 = vmatpush1.msra.mxu0 0.0
  %149 = vmatprep.subr.mxu0 0.0
  %150 = vmatpush1.msra.mxu0 0.0
  %151 = vmatprep.mubr.f32.mxu0 0.0
  %152 = vmatmul.mubr.f32.gmra.mrb[0].mxu0 %v48
  %v153 = vpop.f32.mrb[0].mxu0
  %v154 = vadd.f32 %v45, %v153
  %v155 = vpop.f32.mrb[0].mxu0
  %156 = vmatprep.mubr.f32.mxu0 0.0
  %157 = vmatmul.mubr.f32.gmra.mrb[0].mxu0 %v51
  %v158 = vpop.f32.mrb[0].mxu0
  %v159 = vadd.f32 %v45, %v158
  %v160 = vpop.f32.mrb[0].mxu0
  %161 = vmatprep.mubr.f32.mxu0 0.0
  %162 = vmatmul.mubr.f32.gmra.mrb[0].mxu0 %v54
  %v163 = vpop.f32.mrb[0].mxu0
  %v164 = vadd.f32 %v45, %v163
  %v165 = vpop.f32.mrb[0].mxu0
  %166 = vmatprep.mubr.f32.mxu0 0.0
  %167 = vmatmul.mubr.f32.gmra.mrb[0].mxu0 %v57
  %v168 = vpop.f32.mrb[0].mxu0
  %v169 = vadd.f32 %v45, %v168
  %v170 = vpop.f32.mrb[0].mxu0
  %171 = vmatprep.mubr.f32.mxu0 0.0
  %172 = vmatmul.mubr.f32.gmra.mrb[0].mxu0 %v60
  %v173 = vpop.f32.mrb[0].mxu0
  %v174 = vadd.f32 %v45, %v173
  %v175 = vpop.f32.mrb[0].mxu0
  %176 = vmatprep.mubr.f32.mxu0 0.0
  %177 = vmatmul.mubr.f32.gmra.mrb[0].mxu0 %v63
  %v178 = vpop.f32.mrb[0].mxu0
  %v179 = vadd.f32 %v45, %v178
  %v180 = vpop.f32.mrb[0].mxu0
  %181 = vmatprep.mubr.f32.mxu0 0.0
  %182 = vmatmul.mubr.f32.gmra.mrb[0].mxu0 %v66
  %v183 = vpop.f32.mrb[0].mxu0
  %v184 = vadd.f32 %v45, %v183
  %v185 = vpop.f32.mrb[0].mxu0
  %186 = vmatprep.mubr.f32.mxu0 0.0
  %187 = vmatmul.mubr.f32.gmra.mrb[0].mxu0 %v69
  %v188 = vpop.f32.mrb[0].mxu0
  %v189 = vadd.f32 %v45, %v188
  %v190 = vpop.f32.mrb[0].mxu0
  %191 = vmatprep.mubr.f32.mxu0 0.0
  %192 = vmatmul.mubr.f32.gmra.mrb[0].mxu0 %v72
  %v193 = vpop.f32.mrb[0].mxu0
  %v194 = vadd.f32 %v45, %v193
  %v195 = vpop.f32.mrb[0].mxu0
  %196 = vmatprep.mubr.f32.mxu0 0.0
  %197 = vmatmul.mubr.f32.gmra.mrb[0].mxu0 %v75
  %v198 = vpop.f32.mrb[0].mxu0
  %v199 = vadd.f32 %v45, %v198
  %v200 = vpop.f32.mrb[0].mxu0
  %201 = vmatprep.mubr.f32.mxu0 0.0
  %202 = vmatmul.mubr.f32.gmra.mrb[0].mxu0 %v78
  %v203 = vpop.f32.mrb[0].mxu0
  %v204 = vadd.f32 %v45, %v203
  %v205 = vpop.f32.mrb[0].mxu0
  %206 = vmatprep.mubr.f32.mxu0 0.0
  %207 = vmatmul.mubr.f32.gmra.mrb[0].mxu0 %v81
  %v208 = vpop.f32.mrb[0].mxu0
  %v209 = vadd.f32 %v45, %v208
  %v210 = vpop.f32.mrb[0].mxu0
  %211 = vdwg.mxu0
  %v212 = vmax.f32 %v154, 0.0
  %v213 = vmax.f32 %v159, 0.0
  %v214 = vmax.f32 %v164, 0.0
  %v215 = vmax.f32 %v169, 0.0
  %v216 = vmax.f32 %v174, 0.0
  %v217 = vmax.f32 %v179, 0.0
  %v218 = vmax.f32 %v184, 0.0
  %v219 = vmax.f32 %v189, 0.0
  %v220 = vmax.f32 %v194, 0.0
  %v221 = vmax.f32 %v199, 0.0
  %v222 = vmax.f32 %v204, 0.0
  %v223 = vmax.f32 %v209, 0.0
  %v224 = vpack.c.bf16 %v213, %v212
  %v225 = vpack.c.bf16 %v215, %v214
  %v226 = vpack.c.bf16 %v217, %v216
  %v227 = vpack.c.bf16 %v219, %v218
  %v228 = vpack.c.bf16 %v221, %v220
  %v229 = vpack.c.bf16 %v223, %v222
  %v236 = vunpack.c.l.b16 %v224
  %v237 = vunpack.c.h.b16 %v224
  %v238 = vunpack.c.l.b16 %v225
  %v239 = vunpack.c.h.b16 %v225
  %v240 = vunpack.c.l.b16 %v226
  %v241 = vunpack.c.h.b16 %v226
  %v242 = vunpack.c.l.b16 %v227
  %v243 = vunpack.c.h.b16 %v227
  %v244 = vunpack.c.l.b16 %v228
  %v245 = vunpack.c.h.b16 %v228
  %v246 = vunpack.c.l.b16 %v229
  %v247 = vunpack.c.h.b16 %v229
  %v248 = vpack.c.b16 %v236, %v236
  %v249 = vpack.c.b16 %v237, %v237
  %v250 = vpack.c.b16 %v238, %v238
  %v251 = vpack.c.b16 %v239, %v239
  %v252 = vpack.c.b16 %v240, %v240
  %v253 = vpack.c.b16 %v241, %v241
  %v254 = vpack.c.b16 %v242, %v242
  %v255 = vpack.c.b16 %v243, %v243
  %v256 = vpack.c.b16 %v244, %v244
  %v257 = vpack.c.b16 %v245, %v245
  %v258 = vpack.c.b16 %v246, %v246
  %v259 = vpack.c.b16 %v247, %v247
  %vm272 = vcmask 125952
  %273 = vst.msk [vmem:[%s3] sm:$0xf] %vm272, %v248
  %274 = vst.msk [vmem:[%s3 + $0x4] sm:$0xf] %vm272, %v249
  %275 = vst.msk [vmem:[%s3 + $0x8] sm:$0xf] %vm272, %v250
  %276 = vst.msk [vmem:[%s3 + $0xc] sm:$0xf] %vm272, %v251
  %277 = vst.msk [vmem:[%s3 + $0x10] sm:$0xf] %vm272, %v252
  %278 = vst.msk [vmem:[%s3 + $0x14] sm:$0xf] %vm272, %v253
  %279 = vst.msk [vmem:[%s3 + $0x18] sm:$0xf] %vm272, %v254
  %280 = vst.msk [vmem:[%s3 + $0x1c] sm:$0xf] %vm272, %v255
  %281 = vst.msk [vmem:[%s3 + $0x20] sm:$0xf] %vm272, %v256
  %282 = vst.msk [vmem:[%s3 + $0x24] sm:$0xf] %vm272, %v257
  %283 = vst.msk [vmem:[%s3 + $0x28] sm:$0xf] %vm272, %v258
  %284 = vst.msk [vmem:[%s3 + $0x2c] sm:$0xf] %vm272, %v259
  // Predicated region
  $region14: #{tpu_custom_call.1} parent=0 // pred_check
    _
  $region15: #{tpu_custom_call.1} parent=0 // pred_check_branch
    %286 = sbr.rel (0) target = $region17
  $region16: #{tpu_custom_call.1} parent=0 // pred_region
    _
  $region17: #{tpu_custom_call.1} parent=0 // pred_fallthru
    _
  // Predicated region
  $region18: #{tpu_custom_call.1} parent=0 // pred_check
    _
  $region19: #{tpu_custom_call.1} parent=0 // pred_check_branch
    %288 = sbr.rel (0) target = $region21
  $region20: #{tpu_custom_call.1} parent=0 // pred_region
    _
  $region21: #{tpu_custom_call.1} parent=0 // pred_fallthru
    _

</llo_original>
